<compile_context>
chip_gen: v5e
topology: v5e:2x2
jax: 0.10.0
libtpu: 0.0.40
codegen_flags: <defaults>
</compile_context>

<pallas_src>
import functools

import jax
import jax.numpy as jnp
from jax import lax
from jax.experimental import pallas as pl
from jax.experimental.pallas import tpu as pltpu


def _round_up(x, m):
    return (x + m - 1) // m * m


def _eql_kernel(logits_ref, label_ref, thresh_ref, out_ref, *,
                n_i, tm, tiles_per_split, bf16_softplus):
    """One (tm, n_c) row tile; accumulates into the resident (1, 8, n_c)
    output block of this parallel split."""
    t = pl.program_id(1)

    @pl.when(t == 0)
    def _init():
        out_ref[...] = jnp.zeros_like(out_ref)

    x_in = logits_ref[...]                       # (tm, n_c), f32 or bf16
    x = x_in.astype(jnp.float32)
    labels = label_ref[...]                      # (tm, 1) int32, background id == n_c
    thresh = thresh_ref[...]                     # (1, n_c) f32 0/1 rare-class mask (resident)

    n_c = x.shape[-1]

    # expand_label: one-hot over n_c+1 classes, keep first n_c columns
    # (background rows -> all-zero target).
    col_ids = lax.broadcasted_iota(jnp.int32, (tm, n_c), 1)
    target = (col_ids == labels).astype(jnp.float32)

    # exclude_func: 1 for rows whose gt class is not background.
    exclude = (labels != n_c).astype(jnp.float32)             # (tm, 1)

    # eql weight: 1 - e*th*(1-target) == 1 - et + et*target (fewer VALU ops).
    et = exclude * thresh                                      # (tm, n_c) broadcast
    eql_w = 1.0 - et + et * target

    # binary_cross_entropy_with_logits, reduction='none' (stable form).
    # The softplus term is the EUP-bound part (2 transcendentals/elem); it can
    # run in bf16 on bf16-native EUP chips (v6e/v7x) while the rest stays f32.
    if bf16_softplus:
        xb = x_in if x_in.dtype == jnp.bfloat16 else x_in.astype(jnp.bfloat16)
        softplus = jnp.log1p(jnp.exp(-jnp.abs(xb))).astype(jnp.float32)
    else:
        softplus = jnp.log1p(jnp.exp(-jnp.abs(x)))
    bce = jnp.maximum(x, 0.0) - x * target + softplus

    # Ragged-tile / duplicate-tile masking: global row index computed from the
    # UN-clamped tile index, so both the partially-OOB last tile and any
    # clamped duplicate tile contribute exactly zero.  jnp.where is a select,
    # so garbage read from the partial DMA can never poison the sum.
    tile_idx = pl.program_id(0) * tiles_per_split + t
    row_start = tile_idx * tm
    row_ids = row_start + lax.broadcasted_iota(jnp.int32, (tm, 1), 0)
    weighted = jnp.where(row_ids < n_i, bce * eql_w, 0.0)      # (tm, n_c)

    # Deferred sublane reduce: fold the tm rows into 8 sublane rows with a
    # tile-aligned reshape (sublane dim split at a multiple of 8 -> free
    # relayout) and pure VPU adds; full-sublane accumulator write.
    if tm == 8:
        partial = weighted                                     # (8, n_c)
    else:
        partial = jnp.sum(weighted.reshape(tm // 8, 8, n_c), axis=0)
    out_ref[...] += partial[None]                              # (1, 8, n_c)


def eql_loss(cls_score, label, freq_info, *, lambda_=0.00177, loss_weight=1.0,
             tile_m=256, num_splits=2, bf16_softplus=None):
    """EQL loss forward.

    cls_score: (n_i, n_c) float32 or bfloat16 logits (bf16 accepted end-to-end,
               halving the dominant HBM read).
    label:     (n_i,) int in [0, n_c]  (n_c == background).
    freq_info: (n_c,) per-class image-count frequency.
    bf16_softplus: None -> auto (on iff cls_score is bf16); force True on v7x
               if the f32-input kernel is EUP-bound.
    num_splits: leading "parallel" grid axis (2 -> both TCs on v7x; harmless
               elsewhere, pass 1 on v5e/v6e if desired).
    """
    n_i, n_c = cls_score.shape
    if bf16_softplus is None:
        bf16_softplus = (cls_score.dtype == jnp.bfloat16)

    # threshold_func: per-class 0/1 mask for rare classes (host-side glue).
    thresh = (jnp.asarray(freq_info, jnp.float32) < lambda_).astype(
        jnp.float32).reshape(1, n_c)
    labels2d = label.astype(jnp.int32).reshape(n_i, 1)

    # Row tiling: tm must be a multiple of 8 (16 for bf16 to match the native
    # (16,128) tile); no padding of the inputs -- ragged tiles are masked.
    sub = 16 if cls_score.dtype == jnp.bfloat16 else 8
    tm = _round_up(max(int(tile_m), sub), sub)
    tm = min(tm, _round_up(n_i, sub))
    num_tiles = pl.cdiv(n_i, tm)
    num_splits = max(1, min(int(num_splits), num_tiles))
    tiles_per_split = pl.cdiv(num_tiles, num_splits)
    last_tile = num_tiles - 1

    def row_block(s, t):
        # Clamp so the DMA never starts past the array end; the kernel masks
        # the duplicate / ragged rows based on the un-clamped tile index.
        return (jnp.minimum(s * tiles_per_split + t, last_tile), 0)

    kernel = functools.partial(
        _eql_kernel, n_i=n_i, tm=tm, tiles_per_split=tiles_per_split,
        bf16_softplus=bool(bf16_softplus))

    itemsize = jnp.dtype(cls_score.dtype).itemsize
    cost = pl.CostEstimate(
        flops=10 * n_i * n_c,
        transcendentals=2 * n_i * n_c,
        bytes_accessed=(n_i * n_c * itemsize          # logits
                        + n_i * 4 + n_c * 4           # labels + threshold
                        + num_splits * 8 * n_c * 4))  # partial-sum outputs

    partials = pl.pallas_call(
        kernel,
        out_shape=jax.ShapeDtypeStruct((num_splits, 8, n_c), jnp.float32),
        grid=(num_splits, tiles_per_split),
        in_specs=[
            # logits: (tm, full class axis) -> lane-dense, auto double-buffered
            pl.BlockSpec((tm, n_c), row_block),
            # labels: narrow int32 column alongside the logit tile
            pl.BlockSpec((tm, 1), row_block),
            # threshold mask: resident across the whole grid (single DMA)
            pl.BlockSpec((1, n_c), lambda s, t: (0, 0)),
        ],
        # One resident (1, 8, n_c) f32 accumulator block per parallel split.
        out_specs=pl.BlockSpec((1, 8, n_c), lambda s, t: (s, 0, 0)),
        compiler_params=pltpu.CompilerParams(
            dimension_semantics=("parallel", "arbitrary"),
            vmem_limit_bytes=32 * 1024 * 1024),
        cost_estimate=cost,
    )(cls_score, labels2d, thresh)

    # Final 8-way sublane + cross-lane + cross-split reduce and scaling (tiny).
    return (loss_weight / n_i) * jnp.sum(partials)


def _reference(cls_score, label, freq_info, lambda_=0.00177, loss_weight=1.0):
    n_i, n_c = cls_score.shape
    target = jax.nn.one_hot(label, n_c + 1, dtype=jnp.float32)[:, :n_c]
    exclude = (label != n_c).astype(jnp.float32)[:, None]
    thresh = (jnp.asarray(freq_info, jnp.float32) < lambda_).astype(jnp.float32)[None, :]
    eql_w = 1.0 - exclude * thresh * (1.0 - target)
    x = cls_score.astype(jnp.float32)
    bce = jnp.maximum(x, 0.0) - x * target + jnp.log1p(jnp.exp(-jnp.abs(x)))
    return loss_weight * jnp.sum(bce * eql_w) / n_i


if __name__ == "__main__":
    key = jax.random.PRNGKey(0)
    k1, k2, k3 = jax.random.split(key, 3)

    n_i, n_c = 24, 16          # 24 samples, 16 foreground classes (+1 background id = 16)
    lambda_ = 0.00177
    loss_weight = 1.0

    # Deterministic synthetic "image count frequency" (stand-in for LVIS stats):
    # roughly half the classes fall below lambda_ so both branches are exercised.
    freq_info = jax.random.uniform(k3, (n_c,), minval=0.0, maxval=2.0 * lambda_)

    cls_score = jax.random.normal(k1, (n_i, n_c), dtype=jnp.float32)
    label = jax.random.randint(k2, (n_i,), 0, n_c + 1)   # includes background (== n_c)

    # 1) Small tiles + 2-way split: multi-step accumulation + a clamped
    #    duplicate tile (4 grid steps cover 3 real tiles), all masked in-kernel.
    loss = eql_loss(cls_score, label, freq_info, lambda_=lambda_,
                    loss_weight=loss_weight, tile_m=8, num_splits=2)
    loss = jax.block_until_ready(loss)
    ref = _reference(cls_score, label, freq_info, lambda_, loss_weight)
    assert jnp.allclose(loss, ref, rtol=1e-5, atol=1e-5), (loss, ref)

    # 2) Ragged row count (20 rows, 8-row tiles): last tile is a partial DMA,
    #    garbage rows masked to exactly zero.
    loss_r = eql_loss(cls_score[:20], label[:20], freq_info, lambda_=lambda_,
                      loss_weight=loss_weight, tile_m=8, num_splits=2)
    loss_r = jax.block_until_ready(loss_r)
    ref_r = _reference(cls_score[:20], label[:20], freq_info, lambda_, loss_weight)
    assert jnp.allclose(loss_r, ref_r, rtol=1e-5, atol=1e-5), (loss_r, ref_r)

    # 3) tm=16: exercises the deferred sublane-reduce reshape path + ragged tail.
    loss_16 = eql_loss(cls_score, label, freq_info, lambda_=lambda_,
                       loss_weight=loss_weight, tile_m=16, num_splits=2)
    loss_16 = jax.block_until_ready(loss_16)
    assert jnp.allclose(loss_16, ref, rtol=1e-5, atol=1e-5), (loss_16, ref)

    # 4) Default config (tile_m clamped down to the whole row range, 1 tile).
    loss2 = eql_loss(cls_score[:16], label[:16], freq_info,
                     lambda_=lambda_, loss_weight=loss_weight)
    loss2 = jax.block_until_ready(loss2)
    ref2 = _reference(cls_score[:16], label[:16], freq_info, lambda_, loss_weight)
    assert jnp.allclose(loss2, ref2, rtol=1e-5, atol=1e-5), (loss2, ref2)

    # 5) bf16 logits end-to-end (half HBM read); softplus auto-runs in bf16,
    #    accumulation stays f32 -> compare against the f32 reference on the
    #    bf16-rounded inputs with a bf16-appropriate tolerance.
    cls_bf16 = cls_score.astype(jnp.bfloat16)
    loss_bf = eql_loss(cls_bf16, label, freq_info, lambda_=lambda_,
                       loss_weight=loss_weight, tile_m=16, num_splits=2)
    loss_bf = jax.block_until_ready(loss_bf)
    ref_bf = _reference(cls_bf16, label, freq_info, lambda_, loss_weight)
    assert jnp.allclose(loss_bf, ref_bf, rtol=3e-2, atol=3e-2), (loss_bf, ref_bf)

    print("KERNEL_OK")
</pallas_src>

<mosaic_0001>
module attributes {stable_mosaic.version = 11 : i64} {
  func.func @_eql_kernel(%arg0: i32, %arg1: i32, %arg2: memref<8x16xf32, #tpu.memory_space<vmem>>, %arg3: memref<8x1xi32, #tpu.memory_space<vmem>>, %arg4: memref<1x16xf32, #tpu.memory_space<vmem>>, %arg5: memref<1x8x16xf32, #tpu.memory_space<vmem>>) attributes {dimension_semantics = [#tpu.dimension_semantics<parallel>, #tpu.dimension_semantics<arbitrary>], iteration_bounds = array<i64: 2, 2>, scalar_prefetch = 0 : i64, scratch_operands = 0 : i64, tpu.core_type = #tpu.core_type<tc>, window_params = [{transform_indices = @transform_0, window_bounds = array<i64: 8, 16>}, {transform_indices = @transform_1, window_bounds = array<i64: 8, 1>}, {pipeline_mode = #tpu.pipeline_mode<synchronous>, transform_indices = @transform_2, window_bounds = array<i64: 1, 16>}, {transform_indices = @transform_3, window_bounds = array<i64: 1, 8, 16>}]} {
    %c0_i32 = arith.constant 0 : i32
    %0 = arith.cmpi eq, %arg1, %c0_i32 : i32
    %1 = arith.extui %0 : i1 to i32
    %c0_i32_0 = arith.constant 0 : i32
    %2 = arith.cmpi ne, %1, %c0_i32_0 : i32
    scf.if %2 {
      %cst_15 = arith.constant 0.000000e+00 : f32
      %49 = vector.broadcast %cst_15 : f32 to vector<1x8x16xf32>
      %c0_16 = arith.constant 0 : index
      %c0_17 = arith.constant 0 : index
      %c0_18 = arith.constant 0 : index
      %50 = vector.load %arg5[%c0_16, %c0_17, %c0_18] : memref<1x8x16xf32, #tpu.memory_space<vmem>>, vector<1x8x16xf32>
      tpu.vector_store %arg5[%c0_16, %c0_17, %c0_18], %49 {strides = array<i32>} : memref<1x8x16xf32, #tpu.memory_space<vmem>>, vector<1x8x16xf32>,
    } else {
    }
    %c0 = arith.constant 0 : index
    %c0_1 = arith.constant 0 : index
    %3 = vector.load %arg2[%c0, %c0_1] : memref<8x16xf32, #tpu.memory_space<vmem>>, vector<8x16xf32>
    %c0_2 = arith.constant 0 : index
    %c0_3 = arith.constant 0 : index
    %4 = vector.load %arg3[%c0_2, %c0_3] : memref<8x1xi32, #tpu.memory_space<vmem>>, vector<8x1xi32>
    %c0_4 = arith.constant 0 : index
    %c0_5 = arith.constant 0 : index
    %5 = vector.load %arg4[%c0_4, %c0_5] : memref<1x16xf32, #tpu.memory_space<vmem>>, vector<1x16xf32>
    %6 = tpu.iota {dimensions = array<i32: 1>} : vector<8x16xi32>
    %7 = vector.broadcast %4 : vector<8x1xi32> to vector<8x16xi32>
    %8 = arith.cmpi eq, %6, %7 : vector<8x16xi32>
    %9 = arith.extui %8 : vector<8x16xi1> to vector<8x16xi32>
    %10 = arith.sitofp %9 : vector<8x16xi32> to vector<8x16xf32>
    %c16_i32 = arith.constant 16 : i32
    %11 = vector.broadcast %c16_i32 : i32 to vector<8x1xi32>
    %12 = arith.cmpi ne, %4, %11 : vector<8x1xi32>
    %13 = arith.extui %12 : vector<8x1xi1> to vector<8x1xi32>
    %14 = arith.sitofp %13 : vector<8x1xi32> to vector<8x1xf32>
    %15 = vector.broadcast %14 : vector<8x1xf32> to vector<8x16xf32>
    %16 = vector.broadcast %5 : vector<1x16xf32> to vector<8x16xf32>
    %17 = arith.mulf %15, %16 : vector<8x16xf32>
    %cst = arith.constant 1.000000e+00 : f32
    %18 = vector.broadcast %cst : f32 to vector<8x16xf32>
    %19 = arith.subf %18, %17 : vector<8x16xf32>
    %20 = arith.mulf %17, %10 : vector<8x16xf32>
    %21 = arith.addf %19, %20 : vector<8x16xf32>
    %22 = math.absf %3 : vector<8x16xf32>
    %cst_6 = arith.constant 0.000000e+00 : f32
    %23 = vector.broadcast %cst_6 : f32 to vector<8x16xf32>
    %24 = arith.subf %23, %22 : vector<8x16xf32>
    %25 = math.exp %24 : vector<8x16xf32>
    %26 = math.log1p %25 : vector<8x16xf32>
    %cst_7 = arith.constant 0.000000e+00 : f32
    %27 = vector.broadcast %cst_7 : f32 to vector<8x16xf32>
    %28 = arith.maximumf %3, %27 : vector<8x16xf32>
    %29 = arith.mulf %3, %10 : vector<8x16xf32>
    %30 = arith.subf %28, %29 : vector<8x16xf32>
    %31 = arith.addf %30, %26 : vector<8x16xf32>
    %c2_i32 = arith.constant 2 : i32
    %32 = arith.muli %arg0, %c2_i32 : i32
    %33 = arith.addi %32, %arg1 : i32
    %c8_i32 = arith.constant 8 : i32
    %34 = arith.muli %33, %c8_i32 : i32
    %35 = tpu.iota {dimensions = array<i32: 0>} : vector<8x1xi32>
    %36 = vector.broadcast %34 : i32 to vector<8x1xi32>
    %37 = arith.addi %36, %35 : vector<8x1xi32>
    %c24_i32 = arith.constant 24 : i32
    %38 = vector.broadcast %c24_i32 : i32 to vector<8x1xi32>
    %39 = arith.cmpi slt, %37, %38 : vector<8x1xi32>
    %40 = arith.mulf %31, %21 : vector<8x16xf32>
    %cst_8 = arith.constant 0.000000e+00 : f32
    %41 = vector.shape_cast %39 : vector<8x1xi1> to vector<8x1xi1>
    %42 = vector.broadcast %41 : vector<8x1xi1> to vector<8x16xi1>
    %43 = vector.broadcast %cst_8 : f32 to vector<8x16xf32>
    %44 = arith.select %42, %40, %43 : vector<8x16xi1>, vector<8x16xf32>
    %c0_9 = arith.constant 0 : index
    %c0_10 = arith.constant 0 : index
    %c0_11 = arith.constant 0 : index
    %45 = vector.load %arg5[%c0_9, %c0_10, %c0_11] : memref<1x8x16xf32, #tpu.memory_space<vmem>>, vector<1x8x16xf32>
    %46 = vector.shape_cast %44 : vector<8x16xf32> to vector<1x8x16xf32>
    %47 = arith.addf %45, %46 : vector<1x8x16xf32>
    %c0_12 = arith.constant 0 : index
    %c0_13 = arith.constant 0 : index
    %c0_14 = arith.constant 0 : index
    %48 = vector.load %arg5[%c0_12, %c0_13, %c0_14] : memref<1x8x16xf32, #tpu.memory_space<vmem>>, vector<1x8x16xf32>
    tpu.vector_store %arg5[%c0_12, %c0_13, %c0_14], %47 {strides = array<i32>} : memref<1x8x16xf32, #tpu.memory_space<vmem>>, vector<1x8x16xf32>,
    return
  }
  func.func @transform_0(%arg0: i32, %arg1: i32) -> (i32, i32) {
    %c2_i32 = arith.constant 2 : i32
    %0 = arith.muli %arg0, %c2_i32 : i32
    %1 = arith.addi %0, %arg1 : i32
    %c2_i32_0 = arith.constant 2 : i32
    %2 = arith.minsi %1, %c2_i32_0 : i32
    %c0_i32 = arith.constant 0 : i32
    %c0_i32_1 = arith.constant 0 : i32
    return %2, %c0_i32 : i32, i32
  }
  func.func @transform_1(%arg0: i32, %arg1: i32) -> (i32, i32) {
    %c2_i32 = arith.constant 2 : i32
    %0 = arith.muli %arg0, %c2_i32 : i32
    %1 = arith.addi %0, %arg1 : i32
    %c2_i32_0 = arith.constant 2 : i32
    %2 = arith.minsi %1, %c2_i32_0 : i32
    %c0_i32 = arith.constant 0 : i32
    %c0_i32_1 = arith.constant 0 : i32
    return %2, %c0_i32 : i32, i32
  }
  func.func @transform_2(%arg0: i32, %arg1: i32) -> (i32, i32) {
    %c0_i32 = arith.constant 0 : i32
    %c0_i32_0 = arith.constant 0 : i32
    %c0_i32_1 = arith.constant 0 : i32
    return %c0_i32, %c0_i32_0 : i32, i32
  }
  func.func @transform_3(%arg0: i32, %arg1: i32) -> (i32, i32, i32) {
    %c0_i32 = arith.constant 0 : i32
    %c0_i32_0 = arith.constant 0 : i32
    %c0_i32_1 = arith.constant 0 : i32
    return %arg0, %c0_i32, %c0_i32_0 : i32, i32, i32
  }
}

</mosaic_0001>

<llo_original>
// kernel: tpu_custom_call.1
$region0: #{tpu_custom_call.1}
  #allocation0 [shape = 'u32[]', space=smem, size = 0x4, offset = 0x4, fixed_abs, tag = 'smem constant byte address 0x4 - core index']
  #allocation1 [shape = 'u32[72,128]{1,0:T(1,128)}', space=vmem, size = 0x9000, scoped, tag = 'internal scratch']
  %s0 = inlined_call_operand.vmem [shape: f32[24,16], index: 0, kind: input, shape index: {}]
  %s1 = inlined_call_operand.vmem [shape: s32[24,1], index: 1, kind: input, shape index: {}]
  %s2 = inlined_call_operand.vmem [shape: f32[1,16], index: 2, kind: input, shape index: {}]
  %s3 = inlined_call_operand.hbm [shape: f32[2,8,16], index: 3, kind: output, shape index: {}]
  %s4 = sld [smem:[#allocation0]]
  $region49: #{tpu_custom_call.1} parent=0
    _
  %s6 = ssub.s32 1, %s4
  %s7 = scalar_select 0, %s6, %s4
  $region1: #{tpu_custom_call.1} parent=0
    #allocation2 [shape = 'u8[8192]{0}', space=vmem, size = 0x2000, scoped, tag = 'output window, operand 0']
    #allocation3 [shape = 's32[2]{0}', space=sflag, size = 0x8, scoped, tag = 'scoped memory for tpu_custom_call.1']
    %8 = vsyncpa [#allocation3], 0
    %s9 = scalar_lea.sflag [#allocation3], 1
    %10 = vsyncpa %s9, 0
    loop: start=0, step=1, limit=6
    $region2: #{tpu_custom_call.1} parent=1 // loop_pre_header
      _
    $region3: #{tpu_custom_call.1} parent=1 // loop_header
      %s12 = sphi 0, %s16
      %p13 = scmp.ge.s32.totalorder %s12, 6
      %s19 = sphi 0, %s31
      %s20 = sphi 0, %s27
      %s21 = sphi 0, %s19
      %s22 = sphi 0, %s20
      %s23 = sphi 0, %s21
      %s24 = sphi 0, %s22
      %s42 = sphi 0, %s44
      %s45 = sphi 0, %s42
      %s46 = sphi 0, %s45
      %s62 = sphi 0, %s46
      %s76 = sphi 0, %s78
      %s79 = sphi 0, %s76
      %s80 = sphi 0, %s79
      %s96 = sphi 0, %s80
      %s100 = sphi 0, %s100
      %s102 = sphi 0, %s100
      %s103 = sphi 0, %s102
      %s117 = sphi 0, %s103
      %s123 = sphi 0, %s125
      %s126 = sphi 0, %s123
      %s127 = sphi 0, %s126
      %s143 = sphi 0, %s127
    $region4: #{tpu_custom_call.1} parent=1 // loop_header_branch
      %15 = sbr.rel (%p13) target = $region8
    $region5: #{tpu_custom_call.1} parent=1 // loop_body
      %s17 = ssub.s32 %s12, 1
      %s18 = ssub.s32 %s12, 2
      %s25 = sadd.s32 1, %s20
      %p26 = scmp.ge.s32.totalorder %s25, 2
      %s27 = scalar_select %p26, 0, %s25
      %s28 = sadd.s32 1, %s19
      %s29 = scalar_select %p26, %s28, %s19
      %p30 = scmp.ge.s32.totalorder %s29, 2
      %s31 = scalar_select %p30, 0, %s29
      %s32 = smul.u32 %s19, 2
      %s33 = sadd.s32 %s32, %s20
      %p34 = scmp.lt.s32.totalorder %s33, 2
      %s35 = scalar_select %p34, %s33, 2
      %s36 = smul.u32 %s31, 2
      %s37 = sadd.s32 %s36, %s27
      %p38 = scmp.lt.s32.totalorder %s37, 2
      %s39 = scalar_select %p38, %s37, 2
      %s40 = ssub.s32 %s35, %s39
      %p41 = scmp.eq.s32.totalorder %s40, 0
      %s43 = sadd.s32 %s42, 1
      %s44 = scalar_select %p41, %s42, %s43
      %p47 = pneg %p41
      %p48 = scmp.eq.s32.totalorder %s12, 3
      %p49 = por %p47, %p48
      %p50 = scmp.ne.s32.totalorder %s42, %s45
      %p51 = scmp.eq.s32.totalorder %s12, 0
      %p52 = por %p50, %p51
      %p53 = scmp.ne.s32.totalorder %s42, %s45
      %p54 = scmp.eq.s32.totalorder %s17, 3
      %p55 = por %p53, %p54
      %p56 = scmp.ne.s32.totalorder %s45, %s46
      %p57 = scmp.eq.s32.totalorder %s17, 0
      %p58 = por %p56, %p57
      %p59 = scmp.ne.s32.totalorder %s45, %s46
      %p60 = scmp.eq.s32.totalorder %s18, 3
      %p61 = por %p59, %p60
      %p63 = scmp.ne.s32.totalorder %s46, %s62
      %p64 = scmp.eq.s32.totalorder %s18, 0
      %p65 = por %p63, %p64
      %s66 = smul.u32 %s19, 2
      %s67 = sadd.s32 %s66, %s20
      %p68 = scmp.lt.s32.totalorder %s67, 2
      %s69 = scalar_select %p68, %s67, 2
      %s70 = smul.u32 %s31, 2
      %s71 = sadd.s32 %s70, %s27
      %p72 = scmp.lt.s32.totalorder %s71, 2
      %s73 = scalar_select %p72, %s71, 2
      %s74 = ssub.s32 %s69, %s73
      %p75 = scmp.eq.s32.totalorder %s74, 0
      %s77 = sadd.s32 %s76, 1
      %s78 = scalar_select %p75, %s76, %s77
      %p81 = pneg %p75
      %p82 = scmp.eq.s32.totalorder %s12, 3
      %p83 = por %p81, %p82
      %p84 = scmp.ne.s32.totalorder %s76, %s79
      %p85 = scmp.eq.s32.totalorder %s12, 0
      %p86 = por %p84, %p85
      %p87 = scmp.ne.s32.totalorder %s76, %s79
      %p88 = scmp.eq.s32.totalorder %s17, 3
      %p89 = por %p87, %p88
      %p90 = scmp.ne.s32.totalorder %s79, %s80
      %p91 = scmp.eq.s32.totalorder %s17, 0
      %p92 = por %p90, %p91
      %p93 = scmp.ne.s32.totalorder %s79, %s80
      %p94 = scmp.eq.s32.totalorder %s18, 3
      %p95 = por %p93, %p94
      %p97 = scmp.ne.s32.totalorder %s80, %s96
      %p98 = scmp.eq.s32.totalorder %s18, 0
      %p99 = por %p97, %p98
      %s101 = sadd.s32 %s100, 1
      %p104 = scmp.eq.s32.totalorder %s12, 3
      %p105 = scmp.ne.s32.totalorder %s100, %s102
      %p106 = scmp.eq.s32.totalorder %s12, 0
      %p107 = por %p105, %p106
      %p108 = scmp.ne.s32.totalorder %s100, %s102
      %p109 = scmp.eq.s32.totalorder %s17, 3
      %p110 = por %p108, %p109
      %p111 = scmp.ne.s32.totalorder %s102, %s103
      %p112 = scmp.eq.s32.totalorder %s17, 0
      %p113 = por %p111, %p112
      %p114 = scmp.ne.s32.totalorder %s102, %s103
      %p115 = scmp.eq.s32.totalorder %s18, 3
      %p116 = por %p114, %p115
      %p118 = scmp.ne.s32.totalorder %s103, %s117
      %p119 = scmp.eq.s32.totalorder %s18, 0
      %p120 = por %p118, %p119
      %s121 = ssub.s32 %s19, %s31
      %p122 = scmp.eq.s32.totalorder %s121, 0
      %s124 = sadd.s32 %s123, 1
      %s125 = scalar_select %p122, %s123, %s124
      %p128 = pneg %p122
      %p129 = scmp.eq.s32.totalorder %s12, 3
      %p130 = por %p128, %p129
      %p131 = scmp.ne.s32.totalorder %s123, %s126
      %p132 = scmp.eq.s32.totalorder %s12, 0
      %p133 = por %p131, %p132
      %p134 = scmp.ne.s32.totalorder %s123, %s126
      %p135 = scmp.eq.s32.totalorder %s17, 3
      %p136 = por %p134, %p135
      %p137 = scmp.ne.s32.totalorder %s126, %s127
      %p138 = scmp.eq.s32.totalorder %s17, 0
      %p139 = por %p137, %p138
      %p140 = scmp.ne.s32.totalorder %s126, %s127
      %p141 = scmp.eq.s32.totalorder %s18, 3
      %p142 = por %p140, %p141
      %p144 = scmp.ne.s32.totalorder %s127, %s143
      %p145 = scmp.eq.s32.totalorder %s18, 0
      %p146 = por %p144, %p145
      %p147 = scmp.le.s32.totalorder 1, %s12
      %p148 = scmp.lt.s32.totalorder %s12, 5
      %p149 = pnand %p147, %p148
      %p150 = pneg %p149
      // Predicated region
      $region9: #{tpu_custom_call.1} parent=5 // pred_check
        _
      $region10: #{tpu_custom_call.1} parent=5 // pred_check_branch
        %152 = sbr.rel (%p149) target = $region12
      $region11: #{tpu_custom_call.1} parent=5 // pred_region
        %s153 = ssub.s32 %s12, 1
        // Predicated region
        $region13: #{tpu_custom_call.1} parent=11 // pred_check
          %p154 = pneg %p113
        $region14: #{tpu_custom_call.1} parent=11 // pred_check_branch
          %156 = sbr.rel (%p154) target = $region16
        $region15: #{tpu_custom_call.1} parent=11 // pred_region
          _
        $region16: #{tpu_custom_call.1} parent=11 // pred_fallthru
          _
      $region12: #{tpu_custom_call.1} parent=5 // pred_fallthru
        _
      %p157 = scmp.lt.s32.totalorder %s12, 4
      // Predicated region
      $region17: #{tpu_custom_call.1} parent=5 // pred_check
        %p158 = pneg %p157
      $region18: #{tpu_custom_call.1} parent=5 // pred_check_branch
        %160 = sbr.rel (%p158) target = $region20
      $region19: #{tpu_custom_call.1} parent=5 // pred_region
        // Predicated region
        $region21: #{tpu_custom_call.1} parent=19 // pred_check
          %p161 = pneg %p52
        $region22: #{tpu_custom_call.1} parent=19 // pred_check_branch
          %163 = sbr.rel (%p161) target = $region24
        $region23: #{tpu_custom_call.1} parent=19 // pred_region
          %s164 = smul.u32 %s19, 2
          %s165 = sadd.s32 %s164, %s20
          %p166 = scmp.lt.s32.totalorder %s165, 2
          %s167 = scalar_select %p166, %s165, 2
          %p168 = scmp.lt.s32.totalorder %s167, 2
          %s169 = scalar_select %p168, %s167, 2
          %s170 = smul.addr %s169, 8
          %s171 = scalar_lea.vmem %s0, %s170
          %s172 = smul.u32 %s19, 2
          %s173 = sadd.s32 %s172, %s20
          %p174 = scmp.lt.s32.totalorder %s173, 2
          %s175 = scalar_select %p174, %s173, 2
        $region24: #{tpu_custom_call.1} parent=19 // pred_fallthru
          _
        // Predicated region
        $region25: #{tpu_custom_call.1} parent=19 // pred_check
          %p176 = pneg %p86
        $region26: #{tpu_custom_call.1} parent=19 // pred_check_branch
          %178 = sbr.rel (%p176) target = $region28
        $region27: #{tpu_custom_call.1} parent=19 // pred_region
          %s179 = smul.u32 %s19, 2
          %s180 = sadd.s32 %s179, %s20
          %p181 = scmp.lt.s32.totalorder %s180, 2
          %s182 = scalar_select %p181, %s180, 2
          %p183 = scmp.lt.s32.totalorder %s182, 2
          %s184 = scalar_select %p183, %s182, 2
          %s185 = smul.addr %s184, 8
          %s186 = scalar_lea.vmem %s1, %s185
          %s187 = smul.u32 %s19, 2
          %s188 = sadd.s32 %s187, %s20
          %p189 = scmp.lt.s32.totalorder %s188, 2
          %s190 = scalar_select %p189, %s188, 2
        $region28: #{tpu_custom_call.1} parent=19 // pred_fallthru
          _
      $region20: #{tpu_custom_call.1} parent=5 // pred_fallthru
        _
      %p191 = scmp.le.s32.totalorder 1, %s12
      %p192 = scmp.lt.s32.totalorder %s12, 5
      %p193 = pnand %p191, %p192
      %p194 = pneg %p193
      // Predicated region
      $region29: #{tpu_custom_call.1} parent=5 // pred_check
        _
      $region30: #{tpu_custom_call.1} parent=5 // pred_check_branch
        %196 = sbr.rel (%p193) target = $region32
      $region31: #{tpu_custom_call.1} parent=5 // pred_region
        %s197 = ssub.s32 %s12, 1
        %s198 = smul.u32 %s21, 2
        %s199 = sadd.s32 %s198, %s22
        %p200 = scmp.lt.s32.totalorder %s199, 2
        %s201 = scalar_select %p200, %s199, 2
        %p202 = scmp.lt.s32.totalorder %s201, 2
        %s203 = scalar_select %p202, %s201, 2
        %s204 = smul.addr %s203, 8
        %s205 = scalar_lea.vmem %s0, %s204
        %p206 = pneg %p58
        %p207 = pneg %p55
        %s208 = smul.u32 %s21, 2
        %s209 = sadd.s32 %s208, %s22
        %p210 = scmp.lt.s32.totalorder %s209, 2
        %s211 = scalar_select %p210, %s209, 2
        %p212 = scmp.lt.s32.totalorder %s211, 2
        %s213 = scalar_select %p212, %s211, 2
        %s214 = smul.addr %s213, 8
        %s215 = scalar_lea.vmem %s1, %s214
        %p216 = pneg %p92
        %p217 = pneg %p89
        %p218 = pneg %p113
        %p219 = pneg %p110
        %p220 = pneg %p139
        %p221 = pneg %p136
        %s222 = sand.u32 %s126, 1
        %s223 = scalar_lea.sflag [#allocation3], %s222
        %s224 = sand.u32 %s126, 1
        %s225 = smul.addr %s224, 8
        %s226 = scalar_lea.vmem [#allocation2], %s225
        %s227 = smul.u32 %s21, 2
        %s228 = sadd.s32 %s227, %s22
        %p229 = scmp.lt.s32.totalorder %s228, 2
        %s230 = scalar_select %p229, %s228, 2
        %p231 = scmp.lt.s32.totalorder %s230, 2
        %s232 = scalar_select %p231, %s230, 2
        %s233 = smul.addr %s232, 8
        %s234 = scalar_lea.vmem %s0, %s233
        %s235 = smul.u32 %s21, 2
        %s236 = sadd.s32 %s235, %s22
        %p237 = scmp.lt.s32.totalorder %s236, 2
        %s238 = scalar_select %p237, %s236, 2
        %s239 = smul.u32 %s21, 2
        %s240 = sadd.s32 %s239, %s22
        %p241 = scmp.lt.s32.totalorder %s240, 2
        %s242 = scalar_select %p241, %s240, 2
        %p243 = scmp.lt.s32.totalorder %s242, 2
        %s244 = scalar_select %p243, %s242, 2
        %s245 = smul.addr %s244, 8
        %s246 = scalar_lea.vmem %s1, %s245
        %s247 = smul.u32 %s21, 2
        %s248 = sadd.s32 %s247, %s22
        %p249 = scmp.lt.s32.totalorder %s248, 2
        %s250 = scalar_select %p249, %s248, 2
        %p251 = scmp.eq.s32.totalorder %s22, 0
        // Predicated region
        $region33: #{tpu_custom_call.1} parent=31 // pred_check
          %p252 = pneg %p251
        $region34: #{tpu_custom_call.1} parent=31 // pred_check_branch
          %254 = sbr.rel (%p252) target = $region36
        $region35: #{tpu_custom_call.1} parent=31 // pred_region
          %vm255 = vcmask 130048
          %256 = vst.msk [vmem:[%s226] sm:$0xff] %vm255, 0.0
        $region36: #{tpu_custom_call.1} parent=31 // pred_fallthru
          _
        %v257 = vld [vmem:[%s234] sm:$0xff]
        %v258 = vld [vmem:[%s246] sm:$0xff]
        %v259 = vld [vmem:[%s2] sm:$0x1]
        %v260 = vlaneseq
        %v261 = vand.u32 %v260, 127
        %262 = vset.pattern.permute.xlu0 0
        %263 = vperm.xlu0 %262, %v258
        %v264 = vpop.permute.xlu0 %263
        %vm265 = vcmp.eq.s32.totalorder %v261, %v264
        %v266 = vsel %vm265, 1, 0
        %v267 = vcvt.s32.f32 %v266
        %vm268 = vcmp.ne.s32.totalorder %v258, 16
        %v269 = vsel %vm268, 1, 0
        %v270 = vcvt.s32.f32 %v269
        %272 = vset.pattern.permute.xlu0 0
        %273 = vperm.xlu0 %272, %v270
        %v274 = vpop.permute.xlu0 %273
        %v277 = vperm.slane %v259, 0
        %v279 = vmul.f32 %v274, %v277
        %v280 = vsub.f32 1.0, %v279
        %v281 = vmul.f32 %v279, %v267
        %v282 = vadd.f32 %v280, %v281
        %v283 = vand.u32 2147483647, %v257
        %v284 = vsub.f32 0.0, %v283
        %v285 = vmul.f32 %v284, 1.442695
        %v286 = vpow.pop %v285
        %v287 = vadd.f32 %v286, 1.0
        %v288 = vlog2.pop %v287
        %v289 = vmul.f32 %v288, 0.6931472
        %v290 = vmul.f32 -0.5, %v286
        %v291 = vadd.f32 %v290, 1.0
        %v292 = vmul.f32 %v291, %v286
        %v293 = vand.u32 2147483647, %v286
        %vm294 = vcmp.lt.f32.partialorder %v293, 0.0004427343
        %v295 = vsel %vm294, %v292, %v289
        %v296 = vmax.f32 %v257, 0.0
        %v297 = vmul.f32 %v257, %v267
        %v298 = vsub.f32 %v296, %v297
        %v299 = vadd.f32 %v298, %v295
        %s300 = smul.u32 %s21, 2
        %s301 = sadd.s32 %s300, %s22
        %s302 = smul.u32 %s301, 8
        %v303 = vlaneseq
        %v304 = vshrl.u32 %v303, 7
        %v305 = vstv %s302
        %v306 = vadd.s32 %v305, %v304
        %vm307 = vcmp.lt.s32.totalorder %v306, 24
        %v308 = vmul.f32 %v299, %v282
        %v309 = vsel %vm307, 1, 0
        %vm310 = vcmp.eq.s32.totalorder %v309, 1
        %v311 = vsel %vm310, %v308, 0.0
        %v312 = vld [vmem:[%s226] sm:$0xff]
        %v313 = vadd.f32 %v312, %v311
        %vm314 = vcmask 130048
        %315 = vst.msk [vmem:[%s226] sm:$0xff] %vm314, %v313
        %s316 = sand.u32 %s126, 1
        %s317 = scalar_lea.sflag [#allocation3], %s316
        %s318 = sand.u32 %s126, 1
        %s319 = smul.addr %s318, 8
        %s320 = scalar_lea.vmem [#allocation2], %s319
        // Predicated region
        $region37: #{tpu_custom_call.1} parent=31 // pred_check
          %p321 = pneg %p136
        $region38: #{tpu_custom_call.1} parent=31 // pred_check_branch
          %323 = sbr.rel (%p321) target = $region40
        $region39: #{tpu_custom_call.1} parent=31 // pred_region
          %325 = vsyncadd %s317, 0
          %s326 = smul.addr %s21, 8
          %s327 = scalar_lea.hbm %s3, %s326
          %s329 = sshll.u32 %s320, 4
          %s330 = int_to_ptr.vmem [resolvable:$true] %s329
          %s331 = sshll.u32 %s327, 4
          %s332 = int_to_ptr.hbm [resolvable:$true] %s331
          %334 = dma.vmem_to_hbm [thread:$0]  %s330, 128, %s332, %s317
        $region40: #{tpu_custom_call.1} parent=31 // pred_fallthru
          _
      $region32: #{tpu_custom_call.1} parent=5 // pred_fallthru
        _
      %p335 = scmp.le.s32.totalorder 2, %s12
      // Predicated region
      $region41: #{tpu_custom_call.1} parent=5 // pred_check
        %p336 = pneg %p335
      $region42: #{tpu_custom_call.1} parent=5 // pred_check_branch
        %338 = sbr.rel (%p336) target = $region44
      $region43: #{tpu_custom_call.1} parent=5 // pred_region
        %s339 = ssub.s32 %s12, 2
        // Predicated region
        $region45: #{tpu_custom_call.1} parent=43 // pred_check
          %p340 = pneg %p142
        $region46: #{tpu_custom_call.1} parent=43 // pred_check_branch
          %342 = sbr.rel (%p340) target = $region48
        $region47: #{tpu_custom_call.1} parent=43 // pred_region
          %s343 = sand.u32 %s127, 1
          %s344 = scalar_lea.sflag [#allocation3], %s343
          %s345 = sand.u32 %s127, 1
          %s346 = smul.addr %s345, 8
          %s347 = scalar_lea.vmem [#allocation2], %s346
          %349 = dma.done %s344, 128
        $region48: #{tpu_custom_call.1} parent=43 // pred_fallthru
          _
      $region44: #{tpu_custom_call.1} parent=5 // pred_fallthru
        _
    $region6: #{tpu_custom_call.1} parent=1 // loop_footer
      %s16 = sadd.s32 1, %s12
    $region7: #{tpu_custom_call.1} parent=1 // loop_footer_branch
      %11 = sbr.rel target = $region3
    $region8: #{tpu_custom_call.1} parent=1 // loop_exit
      _
    %350 = vsyncpa [#allocation3], 1
    %s351 = scalar_lea.sflag [#allocation3], 1
    %352 = vsyncpa %s351, 1

</llo_original>
